<compile_context>
chip_gen: v6e
topology: v6e:2x2x1
jax: 0.10.0
libtpu: 0.0.40
codegen_flags: <defaults>
</compile_context>

<pallas_src>
import functools

import jax
import jax.numpy as jnp
import numpy as np
from jax.experimental import pallas as pl
from jax.experimental.pallas import tpu as pltpu


def _fused_conv_kernel(x_ref, p_ref, o_ref, *, cin, co1, co2):
    # x_ref: (cin+1, L)  rows 0..cin-1: even-sampled pixels of ALL images (batch folded
    #                    into the L lanes) with conv1's zero ring; row cin: mask of output
    #                    pixels that fall on conv2's own zero padding; lane tail is padding.
    # p_ref: (co1, cin + 1 + co1 + 1)  parameter slab [w1 | b1 | w2 | b2].
    # o_ref: (co2, L)
    def hardsig6(v):
        return jnp.clip(v + 3.0, 0.0, 6.0) * (1.0 / 6.0)

    lanes = x_ref.shape[-1]
    x = x_ref[...]
    prm = p_ref[...]
    w1 = prm[:, 0:cin]                         # (co1, cin)
    b1 = prm[:, cin:cin + 1]                   # (co1, 1)
    w2 = prm[:, cin + 1:cin + 1 + co1]         # (co2, co1)
    b2 = prm[:, cin + 1 + co1:cin + 2 + co1]   # (co2, 1)

    # conv1 (1x1) + hard-sigmoid-6: cin rank-1 FMAs over the whole batch at once.
    h = jnp.broadcast_to(b1, (co1, lanes))
    for c in range(cin):
        h = h + w1[:, c:c + 1] * x[c:c + 1, :]
    h = hardsig6(h)

    # conv2 (1x1; the stride-2 sampling already happened in the wrapper) + hard-sigmoid-6.
    y = jnp.broadcast_to(b2, (co2, lanes))
    for c in range(co1):
        y = y + w2[:, c:c + 1] * h[c:c + 1, :]
    y = hardsig6(y)

    # Output pixels sitting on conv2's own zero padding see only its bias.
    is_pad = x[cin:cin + 1, :] > 0.5           # (1, L), broadcasts over channels
    pad_val = jnp.broadcast_to(hardsig6(b2), (co2, lanes))
    o_ref[...] = jnp.where(is_pad, pad_val, y)


def _forward_impl(x, w1, b1, w2, b2):
    # x: (N, Cin, H, W) f32 NCHW.  w1: (Co1, Cin), b1: (Co1,), w2: (Co2, Co1), b2: (Co2,)
    n, cin, h, w = x.shape
    co1, co2 = w1.shape[0], w2.shape[0]
    assert w2.shape[1] == co1 and co1 == co2   # slab packing assumes Co1 == Co2 (spec: 8 == 8)

    hh, wh = (h + 1) // 2, (w + 1) // 2        # even-sampled pixels per axis
    h2, w2s = hh + 2, wh + 2                   # final output spatial dims
    p = h2 * w2s
    np_total = n * p
    lanes = ((np_total + 127) // 128) * 128    # lane-dense: pad pixel axis to 128-multiple

    # Even-indexed pixels (the only input pixels conv2 ever sees), channels-first with the
    # batch folded into the pixel/lane axis, plus a zero ring so the pointwise convs
    # reproduce conv1's padding border for free.
    xe = jnp.transpose(x[:, :, ::2, ::2], (1, 0, 2, 3))             # (cin, n, hh, wh)
    xr = jnp.pad(xe, ((0, 0), (0, 0), (1, 1), (1, 1)))              # (cin, n, h2, w2s)
    xf = jnp.pad(xr.reshape(cin, np_total), ((0, 0), (0, lanes - np_total)))

    # Compile-time constant mask of output pixels on conv2's OWN zero padding (row/col 0;
    # also the last row/col when H or W is odd), carried as one extra input-slab row.
    m = np.zeros((h2, w2s), np.float32)
    m[0, :] = 1.0
    m[:, 0] = 1.0
    if h % 2 == 1:
        m[-1, :] = 1.0
    if w % 2 == 1:
        m[:, -1] = 1.0
    m_row = np.zeros((1, lanes), np.float32)
    m_row[0, :np_total] = np.tile(m.reshape(-1), n)
    x_in = jnp.concatenate([xf, jnp.asarray(m_row)], axis=0)        # (cin+1, lanes)

    # Single parameter slab [w1 | b1 | w2 | b2]: one DMA / one buffer instead of four.
    params = jnp.concatenate(
        [w1, b1.reshape(co1, 1), w2, b2.reshape(co2, 1)], axis=1)   # (co1, cin + co1 + 2)

    kernel = functools.partial(_fused_conv_kernel, cin=cin, co1=co1, co2=co2)
    out_flat = pl.pallas_call(
        kernel,
        out_shape=jax.ShapeDtypeStruct((co2, lanes), x.dtype),
        grid=(1,),
        in_specs=[
            pl.BlockSpec((cin + 1, lanes), lambda i: (0, 0)),
            pl.BlockSpec((co1, cin + co1 + 2), lambda i: (0, 0)),
        ],
        out_specs=pl.BlockSpec((co2, lanes), lambda i: (0, 0)),
        compiler_params=pltpu.CompilerParams(dimension_semantics=("arbitrary",)),
        cost_estimate=pl.CostEstimate(
            flops=2 * lanes * (cin * co1 + co1 * co2),
            transcendentals=0,
            bytes_accessed=4 * ((cin + 1) * lanes + co2 * lanes + co1 * (cin + co1 + 2)),
        ),
    )(x_in, params)

    # Drop the lane padding and restore NCHW.
    out = out_flat[:, :np_total].reshape(co2, n, h2, w2s)
    return jnp.transpose(out, (1, 0, 2, 3))


model_forward = jax.jit(_forward_impl)


def _reference_forward(x, w1, b1, w2, b2):
    # Pure-JAX reference using lax convolutions (verification only).
    hi = jax.lax.Precision.HIGHEST
    k1 = w1[:, :, None, None]                  # OIHW
    y1 = jax.lax.conv_general_dilated(
        x, k1, window_strides=(1, 1), padding=((1, 1), (1, 1)),
        dimension_numbers=("NCHW", "OIHW", "NCHW"), precision=hi)
    y1 = y1 + b1.reshape(1, -1, 1, 1)
    v3 = jnp.clip(y1 + 3.0, 0.0, 6.0) / 6.0
    k2 = w2[:, :, None, None]
    y2 = jax.lax.conv_general_dilated(
        v3, k2, window_strides=(2, 2), padding=((1, 1), (1, 1)),
        dimension_numbers=("NCHW", "OIHW", "NCHW"), precision=hi)
    y2 = y2 + b2.reshape(1, -1, 1, 1)
    return jnp.clip(y2 + 3.0, 0.0, 6.0) / 6.0


if __name__ == "__main__":
    key = jax.random.PRNGKey(0)
    kx, k1, k2, k3, k4 = jax.random.split(key, 5)

    # Small shapes consistent with the module: N=2, Cin=3, H=W=16, Cout=8.
    N, Cin, H, W = 2, 3, 16, 16
    Co1, Co2 = 8, 8

    x = jax.random.normal(kx, (N, Cin, H, W), dtype=jnp.float32)
    # PyTorch-convention parameters: weight (Cout, Cin) (1x1 kernel squeezed), bias (Cout,).
    w1 = 0.3 * jax.random.normal(k1, (Co1, Cin), dtype=jnp.float32)
    b1 = 0.1 * jax.random.normal(k2, (Co1,), dtype=jnp.float32)
    w2 = 0.3 * jax.random.normal(k3, (Co2, Co1), dtype=jnp.float32)
    b2 = 0.1 * jax.random.normal(k4, (Co2,), dtype=jnp.float32)

    out = jax.block_until_ready(model_forward(x, w1, b1, w2, b2))
    ref = jax.block_until_ready(_reference_forward(x, w1, b1, w2, b2))

    assert out.shape == (N, Co2, (H + 1) // 2 + 2, (W + 1) // 2 + 2), out.shape
    np.testing.assert_allclose(np.asarray(out), np.asarray(ref), rtol=1e-5, atol=1e-5)

    print("KERNEL_OK")
</pallas_src>

<mosaic_0001>
module attributes {stable_mosaic.version = 11 : i64} {
  func.func @_fused_conv_kernel(%arg0: i32, %arg1: memref<4x256xf32, #tpu.memory_space<vmem>>, %arg2: memref<8x13xf32, #tpu.memory_space<vmem>>, %arg3: memref<8x256xf32, #tpu.memory_space<vmem>>) attributes {dimension_semantics = [#tpu.dimension_semantics<arbitrary>], iteration_bounds = array<i64: 1>, scalar_prefetch = 0 : i64, scratch_operands = 0 : i64, tpu.core_type = #tpu.core_type<tc>, window_params = [{pipeline_mode = #tpu.pipeline_mode<synchronous>, transform_indices = @transform_0, window_bounds = array<i64: 4, 256>}, {pipeline_mode = #tpu.pipeline_mode<synchronous>, transform_indices = @transform_1, window_bounds = array<i64: 8, 13>}, {pipeline_mode = #tpu.pipeline_mode<synchronous>, transform_indices = @transform_2, window_bounds = array<i64: 8, 256>}]} {
    %c0 = arith.constant 0 : index
    %c0_0 = arith.constant 0 : index
    %0 = vector.load %arg1[%c0, %c0_0] : memref<4x256xf32, #tpu.memory_space<vmem>>, vector<4x256xf32>
    %c0_1 = arith.constant 0 : index
    %c0_2 = arith.constant 0 : index
    %1 = vector.load %arg2[%c0_1, %c0_2] : memref<8x13xf32, #tpu.memory_space<vmem>>, vector<8x13xf32>
    %2 = vector.extract_strided_slice %1 {offsets = [0, 0], sizes = [8, 3], strides = [1, 1]} : vector<8x13xf32> to vector<8x3xf32>
    %3 = vector.extract_strided_slice %1 {offsets = [0, 3], sizes = [8, 1], strides = [1, 1]} : vector<8x13xf32> to vector<8x1xf32>
    %4 = vector.extract_strided_slice %1 {offsets = [0, 4], sizes = [8, 8], strides = [1, 1]} : vector<8x13xf32> to vector<8x8xf32>
    %5 = vector.extract_strided_slice %1 {offsets = [0, 12], sizes = [8, 1], strides = [1, 1]} : vector<8x13xf32> to vector<8x1xf32>
    %6 = vector.shape_cast %3 : vector<8x1xf32> to vector<8x1xf32>
    %7 = vector.broadcast %6 : vector<8x1xf32> to vector<8x256xf32>
    %8 = vector.extract_strided_slice %2 {offsets = [0, 0], sizes = [8, 1], strides = [1, 1]} : vector<8x3xf32> to vector<8x1xf32>
    %9 = vector.extract_strided_slice %0 {offsets = [0, 0], sizes = [1, 256], strides = [1, 1]} : vector<4x256xf32> to vector<1x256xf32>
    %10 = vector.broadcast %8 : vector<8x1xf32> to vector<8x256xf32>
    %11 = vector.broadcast %9 : vector<1x256xf32> to vector<8x256xf32>
    %12 = arith.mulf %10, %11 : vector<8x256xf32>
    %13 = arith.addf %7, %12 : vector<8x256xf32>
    %14 = vector.extract_strided_slice %2 {offsets = [0, 1], sizes = [8, 1], strides = [1, 1]} : vector<8x3xf32> to vector<8x1xf32>
    %15 = vector.extract_strided_slice %0 {offsets = [1, 0], sizes = [1, 256], strides = [1, 1]} : vector<4x256xf32> to vector<1x256xf32>
    %16 = vector.broadcast %14 : vector<8x1xf32> to vector<8x256xf32>
    %17 = vector.broadcast %15 : vector<1x256xf32> to vector<8x256xf32>
    %18 = arith.mulf %16, %17 : vector<8x256xf32>
    %19 = arith.addf %13, %18 : vector<8x256xf32>
    %20 = vector.extract_strided_slice %2 {offsets = [0, 2], sizes = [8, 1], strides = [1, 1]} : vector<8x3xf32> to vector<8x1xf32>
    %21 = vector.extract_strided_slice %0 {offsets = [2, 0], sizes = [1, 256], strides = [1, 1]} : vector<4x256xf32> to vector<1x256xf32>
    %22 = vector.broadcast %20 : vector<8x1xf32> to vector<8x256xf32>
    %23 = vector.broadcast %21 : vector<1x256xf32> to vector<8x256xf32>
    %24 = arith.mulf %22, %23 : vector<8x256xf32>
    %25 = arith.addf %19, %24 : vector<8x256xf32>
    %cst = arith.constant 3.000000e+00 : f32
    %26 = vector.broadcast %cst : f32 to vector<8x256xf32>
    %27 = arith.addf %25, %26 : vector<8x256xf32>
    %cst_3 = arith.constant 0.000000e+00 : f32
    %cst_4 = arith.constant 6.000000e+00 : f32
    %28 = vector.broadcast %cst_3 : f32 to vector<8x256xf32>
    %29 = arith.maximumf %28, %27 : vector<8x256xf32>
    %30 = vector.broadcast %cst_4 : f32 to vector<8x256xf32>
    %31 = arith.minimumf %30, %29 : vector<8x256xf32>
    %cst_5 = arith.constant 0.166666672 : f32
    %32 = vector.broadcast %cst_5 : f32 to vector<8x256xf32>
    %33 = arith.mulf %31, %32 : vector<8x256xf32>
    %34 = vector.shape_cast %5 : vector<8x1xf32> to vector<8x1xf32>
    %35 = vector.broadcast %34 : vector<8x1xf32> to vector<8x256xf32>
    %36 = vector.extract_strided_slice %4 {offsets = [0, 0], sizes = [8, 1], strides = [1, 1]} : vector<8x8xf32> to vector<8x1xf32>
    %37 = vector.extract_strided_slice %33 {offsets = [0, 0], sizes = [1, 256], strides = [1, 1]} : vector<8x256xf32> to vector<1x256xf32>
    %38 = vector.broadcast %36 : vector<8x1xf32> to vector<8x256xf32>
    %39 = vector.broadcast %37 : vector<1x256xf32> to vector<8x256xf32>
    %40 = arith.mulf %38, %39 : vector<8x256xf32>
    %41 = arith.addf %35, %40 : vector<8x256xf32>
    %42 = vector.extract_strided_slice %4 {offsets = [0, 1], sizes = [8, 1], strides = [1, 1]} : vector<8x8xf32> to vector<8x1xf32>
    %43 = vector.extract_strided_slice %33 {offsets = [1, 0], sizes = [1, 256], strides = [1, 1]} : vector<8x256xf32> to vector<1x256xf32>
    %44 = vector.broadcast %42 : vector<8x1xf32> to vector<8x256xf32>
    %45 = vector.broadcast %43 : vector<1x256xf32> to vector<8x256xf32>
    %46 = arith.mulf %44, %45 : vector<8x256xf32>
    %47 = arith.addf %41, %46 : vector<8x256xf32>
    %48 = vector.extract_strided_slice %4 {offsets = [0, 2], sizes = [8, 1], strides = [1, 1]} : vector<8x8xf32> to vector<8x1xf32>
    %49 = vector.extract_strided_slice %33 {offsets = [2, 0], sizes = [1, 256], strides = [1, 1]} : vector<8x256xf32> to vector<1x256xf32>
    %50 = vector.broadcast %48 : vector<8x1xf32> to vector<8x256xf32>
    %51 = vector.broadcast %49 : vector<1x256xf32> to vector<8x256xf32>
    %52 = arith.mulf %50, %51 : vector<8x256xf32>
    %53 = arith.addf %47, %52 : vector<8x256xf32>
    %54 = vector.extract_strided_slice %4 {offsets = [0, 3], sizes = [8, 1], strides = [1, 1]} : vector<8x8xf32> to vector<8x1xf32>
    %55 = vector.extract_strided_slice %33 {offsets = [3, 0], sizes = [1, 256], strides = [1, 1]} : vector<8x256xf32> to vector<1x256xf32>
    %56 = vector.broadcast %54 : vector<8x1xf32> to vector<8x256xf32>
    %57 = vector.broadcast %55 : vector<1x256xf32> to vector<8x256xf32>
    %58 = arith.mulf %56, %57 : vector<8x256xf32>
    %59 = arith.addf %53, %58 : vector<8x256xf32>
    %60 = vector.extract_strided_slice %4 {offsets = [0, 4], sizes = [8, 1], strides = [1, 1]} : vector<8x8xf32> to vector<8x1xf32>
    %61 = vector.extract_strided_slice %33 {offsets = [4, 0], sizes = [1, 256], strides = [1, 1]} : vector<8x256xf32> to vector<1x256xf32>
    %62 = vector.broadcast %60 : vector<8x1xf32> to vector<8x256xf32>
    %63 = vector.broadcast %61 : vector<1x256xf32> to vector<8x256xf32>
    %64 = arith.mulf %62, %63 : vector<8x256xf32>
    %65 = arith.addf %59, %64 : vector<8x256xf32>
    %66 = vector.extract_strided_slice %4 {offsets = [0, 5], sizes = [8, 1], strides = [1, 1]} : vector<8x8xf32> to vector<8x1xf32>
    %67 = vector.extract_strided_slice %33 {offsets = [5, 0], sizes = [1, 256], strides = [1, 1]} : vector<8x256xf32> to vector<1x256xf32>
    %68 = vector.broadcast %66 : vector<8x1xf32> to vector<8x256xf32>
    %69 = vector.broadcast %67 : vector<1x256xf32> to vector<8x256xf32>
    %70 = arith.mulf %68, %69 : vector<8x256xf32>
    %71 = arith.addf %65, %70 : vector<8x256xf32>
    %72 = vector.extract_strided_slice %4 {offsets = [0, 6], sizes = [8, 1], strides = [1, 1]} : vector<8x8xf32> to vector<8x1xf32>
    %73 = vector.extract_strided_slice %33 {offsets = [6, 0], sizes = [1, 256], strides = [1, 1]} : vector<8x256xf32> to vector<1x256xf32>
    %74 = vector.broadcast %72 : vector<8x1xf32> to vector<8x256xf32>
    %75 = vector.broadcast %73 : vector<1x256xf32> to vector<8x256xf32>
    %76 = arith.mulf %74, %75 : vector<8x256xf32>
    %77 = arith.addf %71, %76 : vector<8x256xf32>
    %78 = vector.extract_strided_slice %4 {offsets = [0, 7], sizes = [8, 1], strides = [1, 1]} : vector<8x8xf32> to vector<8x1xf32>
    %79 = vector.extract_strided_slice %33 {offsets = [7, 0], sizes = [1, 256], strides = [1, 1]} : vector<8x256xf32> to vector<1x256xf32>
    %80 = vector.broadcast %78 : vector<8x1xf32> to vector<8x256xf32>
    %81 = vector.broadcast %79 : vector<1x256xf32> to vector<8x256xf32>
    %82 = arith.mulf %80, %81 : vector<8x256xf32>
    %83 = arith.addf %77, %82 : vector<8x256xf32>
    %cst_6 = arith.constant 3.000000e+00 : f32
    %84 = vector.broadcast %cst_6 : f32 to vector<8x256xf32>
    %85 = arith.addf %83, %84 : vector<8x256xf32>
    %cst_7 = arith.constant 0.000000e+00 : f32
    %cst_8 = arith.constant 6.000000e+00 : f32
    %86 = vector.broadcast %cst_7 : f32 to vector<8x256xf32>
    %87 = arith.maximumf %86, %85 : vector<8x256xf32>
    %88 = vector.broadcast %cst_8 : f32 to vector<8x256xf32>
    %89 = arith.minimumf %88, %87 : vector<8x256xf32>
    %cst_9 = arith.constant 0.166666672 : f32
    %90 = vector.broadcast %cst_9 : f32 to vector<8x256xf32>
    %91 = arith.mulf %89, %90 : vector<8x256xf32>
    %92 = vector.extract_strided_slice %0 {offsets = [3, 0], sizes = [1, 256], strides = [1, 1]} : vector<4x256xf32> to vector<1x256xf32>
    %cst_10 = arith.constant 5.000000e-01 : f32
    %93 = vector.broadcast %cst_10 : f32 to vector<1x256xf32>
    %94 = arith.cmpf ogt, %92, %93 : vector<1x256xf32>
    %cst_11 = arith.constant 3.000000e+00 : f32
    %95 = vector.broadcast %cst_11 : f32 to vector<8x1xf32>
    %96 = arith.addf %5, %95 : vector<8x1xf32>
    %cst_12 = arith.constant 0.000000e+00 : f32
    %cst_13 = arith.constant 6.000000e+00 : f32
    %97 = vector.broadcast %cst_12 : f32 to vector<8x1xf32>
    %98 = arith.maximumf %97, %96 : vector<8x1xf32>
    %99 = vector.broadcast %cst_13 : f32 to vector<8x1xf32>
    %100 = arith.minimumf %99, %98 : vector<8x1xf32>
    %cst_14 = arith.constant 0.166666672 : f32
    %101 = vector.broadcast %cst_14 : f32 to vector<8x1xf32>
    %102 = arith.mulf %100, %101 : vector<8x1xf32>
    %103 = vector.shape_cast %102 : vector<8x1xf32> to vector<8x1xf32>
    %104 = vector.broadcast %103 : vector<8x1xf32> to vector<8x256xf32>
    %105 = vector.shape_cast %94 : vector<1x256xi1> to vector<1x256xi1>
    %106 = vector.broadcast %105 : vector<1x256xi1> to vector<8x256xi1>
    %107 = arith.select %106, %104, %91 : vector<8x256xi1>, vector<8x256xf32>
    %c0_15 = arith.constant 0 : index
    %c0_16 = arith.constant 0 : index
    %108 = vector.load %arg3[%c0_15, %c0_16] : memref<8x256xf32, #tpu.memory_space<vmem>>, vector<8x256xf32>
    tpu.vector_store %arg3[%c0_15, %c0_16], %107 {strides = array<i32>} : memref<8x256xf32, #tpu.memory_space<vmem>>, vector<8x256xf32>,
    return
  }
  func.func @transform_0(%arg0: i32) -> (i32, i32) {
    %c0_i32 = arith.constant 0 : i32
    %c0_i32_0 = arith.constant 0 : i32
    %c0_i32_1 = arith.constant 0 : i32
    return %c0_i32, %c0_i32_0 : i32, i32
  }
  func.func @transform_1(%arg0: i32) -> (i32, i32) {
    %c0_i32 = arith.constant 0 : i32
    %c0_i32_0 = arith.constant 0 : i32
    %c0_i32_1 = arith.constant 0 : i32
    return %c0_i32, %c0_i32_0 : i32, i32
  }
  func.func @transform_2(%arg0: i32) -> (i32, i32) {
    %c0_i32 = arith.constant 0 : i32
    %c0_i32_0 = arith.constant 0 : i32
    %c0_i32_1 = arith.constant 0 : i32
    return %c0_i32, %c0_i32_0 : i32, i32
  }
}

</mosaic_0001>

<llo_original>
// kernel: _forward_impl.1
$region0: #{_forward_impl.1}
  #allocation0 [shape = 'u32[]', space=smem, size = 0x4, offset = 0x4, fixed_abs, tag = 'smem constant byte address 0x4 - core index']
  #allocation1 [shape = 'u32[144,128]{1,0:T(1,128)}', space=vmem, size = 0x12000, scoped, tag = 'internal scratch']
  %s0 = inlined_call_operand.vmem [shape: f32[4,256], index: 0, kind: input, shape index: {}]
  %s1 = inlined_call_operand.vmem [shape: f32[8,13], index: 1, kind: input, shape index: {}]
  %s2 = inlined_call_operand.vmem [shape: f32[8,256], index: 2, kind: output, shape index: {}]
  %s3 = sld [smem:[#allocation0]]
  $region18: #{_forward_impl.1} parent=0
    _
  %s5 = ssub.s32 1, %s3
  %s6 = scalar_select 0, %s5, %s3
  // Predicated region
  $region2: #{_forward_impl.1} parent=0 // pred_check
    _
  $region3: #{_forward_impl.1} parent=0 // pred_check_branch
    %8 = sbr.rel (0) target = $region5
  $region4: #{_forward_impl.1} parent=0 // pred_region
    _
  $region5: #{_forward_impl.1} parent=0 // pred_fallthru
    _
  // Predicated region
  $region6: #{_forward_impl.1} parent=0 // pred_check
    _
  $region7: #{_forward_impl.1} parent=0 // pred_check_branch
    %10 = sbr.rel (0) target = $region9
  $region8: #{_forward_impl.1} parent=0 // pred_region
    _
  $region9: #{_forward_impl.1} parent=0 // pred_fallthru
    _
  %v11 = vld [vmem:[%s0] sm:$0xff]
  %v12 = vld [vmem:[%s1] sm:$0xff]
  %14 = vset.pattern.permute.xlu0 3
  %15 = vperm.xlu0 %14, %v12
  %v16 = vpop.permute.xlu0 %15
  %18 = vset.pattern.permute.xlu0 0
  %19 = vperm.xlu0 %18, %v12
  %v20 = vpop.permute.xlu0 %19
  %v23 = vlaneseq
  %v24 = vshrl.u32 %v23, 7
  %v25 = vsub.s32 0, %v24
  %v26 = vrot.slane %v11, %v25
  %v27 = vlaneseq
  %v28 = vshrl.u32 %v27, 7
  %v29 = vsub.s32 4, %v28
  %v30 = vrot.slane %v11, %v29
  %v33 = vlaneseq
  %v34 = vshrl.u32 %v33, 7
  %v35 = vsub.s32 0, %v34
  %v36 = vrot.slane %v26, %v35
  %v37 = vlaneseq
  %v38 = vshrl.u32 %v37, 7
  %v39 = vsub.s32 0, %v38
  %v40 = vrot.slane %v30, %v39
  %v41 = vmul.f32 %v20, %v36
  %v42 = vmul.f32 %v20, %v40
  %v43 = vadd.f32 %v16, %v41
  %v44 = vadd.f32 %v16, %v42
  %45 = vset.pattern.permute.xlu0 1
  %46 = vperm.xlu0 %45, %v12
  %v47 = vpop.permute.xlu0 %46
  %v49 = vlaneseq
  %v50 = vshrl.u32 %v49, 7
  %v51 = vsub.s32 1, %v50
  %v52 = vrot.slane %v11, %v51
  %v53 = vlaneseq
  %v54 = vshrl.u32 %v53, 7
  %v55 = vsub.s32 5, %v54
  %v56 = vrot.slane %v11, %v55
  %v59 = vlaneseq
  %v60 = vshrl.u32 %v59, 7
  %v61 = vsub.s32 1, %v60
  %v62 = vrot.slane %v52, %v61
  %v63 = vlaneseq
  %v64 = vshrl.u32 %v63, 7
  %v65 = vsub.s32 1, %v64
  %v66 = vrot.slane %v56, %v65
  %v67 = vmul.f32 %v47, %v62
  %v68 = vmul.f32 %v47, %v66
  %v69 = vadd.f32 %v43, %v67
  %v70 = vadd.f32 %v44, %v68
  %71 = vset.pattern.permute.xlu0 2
  %72 = vperm.xlu0 %71, %v12
  %v73 = vpop.permute.xlu0 %72
  %v75 = vlaneseq
  %v76 = vshrl.u32 %v75, 7
  %v77 = vsub.s32 2, %v76
  %v78 = vrot.slane %v11, %v77
  %v79 = vlaneseq
  %v80 = vshrl.u32 %v79, 7
  %v81 = vsub.s32 6, %v80
  %v82 = vrot.slane %v11, %v81
  %v85 = vlaneseq
  %v86 = vshrl.u32 %v85, 7
  %v87 = vsub.s32 2, %v86
  %v88 = vrot.slane %v78, %v87
  %v89 = vlaneseq
  %v90 = vshrl.u32 %v89, 7
  %v91 = vsub.s32 2, %v90
  %v92 = vrot.slane %v82, %v91
  %v93 = vmul.f32 %v73, %v88
  %v94 = vmul.f32 %v73, %v92
  %v95 = vadd.f32 %v69, %v93
  %v96 = vadd.f32 %v70, %v94
  %v97 = vadd.f32 %v95, 3.0
  %v98 = vadd.f32 %v96, 3.0
  %v99 = vmax.f32 %v97, 0.0
  %v100 = vmax.f32 %v98, 0.0
  %v101 = vmin.f32 %v99, 6.0
  %v102 = vmin.f32 %v100, 6.0
  %v103 = vmul.f32 %v101, 0.16666667
  %v104 = vmul.f32 %v102, 0.16666667
  %105 = vset.pattern.permute.xlu0 12
  %106 = vperm.xlu0 %105, %v12
  %v107 = vpop.permute.xlu0 %106
  %109 = vset.pattern.permute.xlu0 4
  %110 = vperm.xlu0 %109, %v12
  %v111 = vpop.permute.xlu0 %110
  %v113 = vlaneseq
  %v114 = vshrl.u32 %v113, 7
  %v115 = vsub.s32 0, %v114
  %v116 = vrot.slane %v103, %v115
  %v117 = vlaneseq
  %v118 = vshrl.u32 %v117, 7
  %v119 = vsub.s32 0, %v118
  %v120 = vrot.slane %v104, %v119
  %v121 = vmul.f32 %v111, %v116
  %v122 = vmul.f32 %v111, %v120
  %v123 = vadd.f32 %v107, %v121
  %v124 = vadd.f32 %v107, %v122
  %125 = vset.pattern.permute.xlu0 5
  %126 = vperm.xlu0 %125, %v12
  %v127 = vpop.permute.xlu0 %126
  %v129 = vlaneseq
  %v130 = vshrl.u32 %v129, 7
  %v131 = vsub.s32 1, %v130
  %v132 = vrot.slane %v103, %v131
  %v133 = vlaneseq
  %v134 = vshrl.u32 %v133, 7
  %v135 = vsub.s32 1, %v134
  %v136 = vrot.slane %v104, %v135
  %v137 = vmul.f32 %v127, %v132
  %v138 = vmul.f32 %v127, %v136
  %v139 = vadd.f32 %v123, %v137
  %v140 = vadd.f32 %v124, %v138
  %141 = vset.pattern.permute.xlu0 6
  %142 = vperm.xlu0 %141, %v12
  %v143 = vpop.permute.xlu0 %142
  %v145 = vlaneseq
  %v146 = vshrl.u32 %v145, 7
  %v147 = vsub.s32 2, %v146
  %v148 = vrot.slane %v103, %v147
  %v149 = vlaneseq
  %v150 = vshrl.u32 %v149, 7
  %v151 = vsub.s32 2, %v150
  %v152 = vrot.slane %v104, %v151
  %v153 = vmul.f32 %v143, %v148
  %v154 = vmul.f32 %v143, %v152
  %v155 = vadd.f32 %v139, %v153
  %v156 = vadd.f32 %v140, %v154
  %157 = vset.pattern.permute.xlu0 7
  %158 = vperm.xlu0 %157, %v12
  %v159 = vpop.permute.xlu0 %158
  %v161 = vlaneseq
  %v162 = vshrl.u32 %v161, 7
  %v163 = vsub.s32 3, %v162
  %v164 = vrot.slane %v103, %v163
  %v165 = vlaneseq
  %v166 = vshrl.u32 %v165, 7
  %v167 = vsub.s32 3, %v166
  %v168 = vrot.slane %v104, %v167
  %v169 = vmul.f32 %v159, %v164
  %v170 = vmul.f32 %v159, %v168
  %v171 = vadd.f32 %v155, %v169
  %v172 = vadd.f32 %v156, %v170
  %173 = vset.pattern.permute.xlu0 8
  %174 = vperm.xlu0 %173, %v12
  %v175 = vpop.permute.xlu0 %174
  %v177 = vlaneseq
  %v178 = vshrl.u32 %v177, 7
  %v179 = vsub.s32 4, %v178
  %v180 = vrot.slane %v103, %v179
  %v181 = vlaneseq
  %v182 = vshrl.u32 %v181, 7
  %v183 = vsub.s32 4, %v182
  %v184 = vrot.slane %v104, %v183
  %v185 = vmul.f32 %v175, %v180
  %v186 = vmul.f32 %v175, %v184
  %v187 = vadd.f32 %v171, %v185
  %v188 = vadd.f32 %v172, %v186
  %189 = vset.pattern.permute.xlu0 9
  %190 = vperm.xlu0 %189, %v12
  %v191 = vpop.permute.xlu0 %190
  %v193 = vlaneseq
  %v194 = vshrl.u32 %v193, 7
  %v195 = vsub.s32 5, %v194
  %v196 = vrot.slane %v103, %v195
  %v197 = vlaneseq
  %v198 = vshrl.u32 %v197, 7
  %v199 = vsub.s32 5, %v198
  %v200 = vrot.slane %v104, %v199
  %v201 = vmul.f32 %v191, %v196
  %v202 = vmul.f32 %v191, %v200
  %v203 = vadd.f32 %v187, %v201
  %v204 = vadd.f32 %v188, %v202
  %205 = vset.pattern.permute.xlu0 10
  %206 = vperm.xlu0 %205, %v12
  %v207 = vpop.permute.xlu0 %206
  %v209 = vlaneseq
  %v210 = vshrl.u32 %v209, 7
  %v211 = vsub.s32 6, %v210
  %v212 = vrot.slane %v103, %v211
  %v213 = vlaneseq
  %v214 = vshrl.u32 %v213, 7
  %v215 = vsub.s32 6, %v214
  %v216 = vrot.slane %v104, %v215
  %v217 = vmul.f32 %v207, %v212
  %v218 = vmul.f32 %v207, %v216
  %v219 = vadd.f32 %v203, %v217
  %v220 = vadd.f32 %v204, %v218
  %221 = vset.pattern.permute.xlu0 11
  %222 = vperm.xlu0 %221, %v12
  %v223 = vpop.permute.xlu0 %222
  %v225 = vlaneseq
  %v226 = vshrl.u32 %v225, 7
  %v227 = vsub.s32 7, %v226
  %v228 = vrot.slane %v103, %v227
  %v229 = vlaneseq
  %v230 = vshrl.u32 %v229, 7
  %v231 = vsub.s32 7, %v230
  %v232 = vrot.slane %v104, %v231
  %v233 = vmul.f32 %v223, %v228
  %v234 = vmul.f32 %v223, %v232
  %v235 = vadd.f32 %v219, %v233
  %v236 = vadd.f32 %v220, %v234
  %v237 = vadd.f32 %v235, 3.0
  %v238 = vadd.f32 %v236, 3.0
  %v239 = vmax.f32 %v237, 0.0
  %v240 = vmax.f32 %v238, 0.0
  %v241 = vmin.f32 %v239, 6.0
  %v242 = vmin.f32 %v240, 6.0
  %v243 = vmul.f32 %v241, 0.16666667
  %v244 = vmul.f32 %v242, 0.16666667
  %vm245 = vcmp.gt.f32.partialorder %v11, 0.5
  %v246 = vadd.f32 %v12, 3.0
  %v247 = vmax.f32 %v246, 0.0
  %v248 = vmin.f32 %v247, 6.0
  %v249 = vmul.f32 %v248, 0.16666667
  %251 = vset.pattern.permute.xlu0 12
  %252 = vperm.xlu0 %251, %v249
  %v253 = vpop.permute.xlu0 %252
  %v255 = vsel %vm245, 1, 0
  %v256 = vlaneseq
  %v257 = vshrl.u32 %v256, 7
  %v258 = vsub.s32 3, %v257
  %v259 = vrot.slane %v255, %v258
  %v260 = vlaneseq
  %v261 = vshrl.u32 %v260, 7
  %v262 = vsub.s32 7, %v261
  %v263 = vrot.slane %v255, %v262
  %v264 = vlaneseq
  %v265 = vshrl.u32 %v264, 7
  %v266 = vsub.s32 3, %v265
  %v267 = vrot.slane %v259, %v266
  %v268 = vlaneseq
  %v269 = vshrl.u32 %v268, 7
  %v270 = vsub.s32 3, %v269
  %v271 = vrot.slane %v263, %v270
  %vm272 = vcmp.eq.s32.totalorder %v267, 1
  %vm273 = vcmp.eq.s32.totalorder %v271, 1
  %v274 = vsel %vm272, %v253, %v243
  %v275 = vsel %vm273, %v253, %v244
  %276 = vst [vmem:[%s2] sm:$0xff] %v274
  %277 = vst [vmem:[%s2 + $0x8] sm:$0xff] %v275
  // Predicated region
  $region10: #{_forward_impl.1} parent=0 // pred_check
    _
  $region11: #{_forward_impl.1} parent=0 // pred_check_branch
    %279 = sbr.rel (0) target = $region13
  $region12: #{_forward_impl.1} parent=0 // pred_region
    _
  $region13: #{_forward_impl.1} parent=0 // pred_fallthru
    _
  // Predicated region
  $region14: #{_forward_impl.1} parent=0 // pred_check
    _
  $region15: #{_forward_impl.1} parent=0 // pred_check_branch
    %281 = sbr.rel (0) target = $region17
  $region16: #{_forward_impl.1} parent=0 // pred_region
    _
  $region17: #{_forward_impl.1} parent=0 // pred_fallthru
    _

</llo_original>
